<compile_context>
chip_gen: v6e
topology: v6e:2x2x1
jax: 0.10.0
libtpu: 0.0.40
codegen_flags: <defaults>
</compile_context>

<pallas_src>
import functools

import jax
import jax.numpy as jnp
from jax.experimental import pallas as pl
from jax.experimental.pallas import tpu as pltpu

HID1, HID2, HID3, OUT = 64, 64, 32, 1
LANES = 128        # hidden activations are zero-padded to one full vreg lane width
ROW_ALIGN = 16     # sublane alignment of each packed parameter block (covers f32 & bf16)


def _round_up(n, m):
    return (n + m - 1) // m * m


def pack_params(params, input_size, dtype=jnp.bfloat16):
    """Pack all weights/biases into a single (R, 128) buffer (one resident DMA).

    Layers 1-3 are stored as (K_pad, 128) weight blocks (output dim zero-padded to 128
    lanes) followed by a (16, 128) bias row.  Layer 4 is stored TRANSPOSED as a single
    (1, 32) row (zero-padded to (16, 128)) so the kernel can do the final 32 -> 1
    projection as a VPU multiply + lane reduce instead of a padded MXU matmul.

    Returns (packed, offsets, in_pad) with offsets[i] = (w_row_offset, b_row_offset)
    as static Python ints.
    """
    in_pad = _round_up(input_size, ROW_ALIGN)
    specs = [
        (params["w1"], params["b1"], in_pad, False),
        (params["w2"], params["b2"], LANES, False),
        (params["w3"], params["b3"], LANES, False),
        (params["w4"], params["b4"], ROW_ALIGN, True),   # stored as w4^T row
    ]
    blocks, offsets, row = [], [], 0
    for w, b, k_pad, transposed in specs:
        if transposed:
            w = w.T                                       # (1, 32)
        k_real, n_real = w.shape
        wp = jnp.zeros((k_pad, LANES), dtype).at[:k_real, :n_real].set(w.astype(dtype))
        bp = jnp.zeros((ROW_ALIGN, LANES), dtype).at[0, :b.size].set(
            b.reshape(-1).astype(dtype))
        offsets.append((row, row + k_pad))
        blocks.extend([wp, bp])
        row += k_pad + ROW_ALIGN
    return jnp.concatenate(blocks, axis=0), tuple(offsets), in_pad


def mlp_kernel(x_ref, p_ref, o_ref, *, input_size, offsets, matmul_dtype):
    """Fused 4-layer MLP on one (tb, input_size) batch tile; params VMEM-resident.

    Rows of a partial last tile contain unspecified data; their results are discarded
    by the partial output-block writeback (rows are independent, valid rows unaffected).
    """
    k_rows = (input_size, LANES, LANES)          # contraction extents for layers 1..3
    h = x_ref[...].astype(matmul_dtype)          # (tb, input_size)
    a = None
    for li in range(3):                          # unrolled MXU layers (1..3)
        w_off, b_off = offsets[li]
        w = p_ref[pl.ds(w_off, k_rows[li]), :].astype(matmul_dtype)   # (K, 128)
        b = p_ref[pl.ds(b_off, 1), :].astype(jnp.float32)             # (1, 128)
        a = jnp.maximum(jnp.dot(h, w, preferred_element_type=jnp.float32) + b, 0.0)
        h = a.astype(matmul_dtype)
    # Layer 4 (32 -> 1): VPU multiply by the packed w4^T row + XLU lane reduce.
    # The bias row is zero outside lane 0, so it can be folded into the reduce.
    w4_off, b4_off = offsets[3]
    w4 = p_ref[pl.ds(w4_off, 1), :].astype(jnp.float32)               # (1, 128)
    b4 = p_ref[pl.ds(b4_off, 1), :].astype(jnp.float32)               # (1, 128)
    y = jnp.sum(a * w4 + b4, axis=-1, keepdims=True)                  # (tb, 1) f32
    o_ref[...] = y.astype(o_ref.dtype)


def _pick_batch_tile(batch, block_batch):
    """Batch-tile rows: single tile for tiny batches, otherwise 8-aligned tiles capped
    at ceil(batch/2) so the grid has >= 2 steps (keeps both v7x TensorCores busy)."""
    if batch <= 128:
        return batch                              # block == full dim is always legal
    tb = min(block_batch, _round_up(pl.cdiv(batch, 2), 8))
    return max(8, min(tb, _round_up(batch, 8)))


def make_wine_quality_forward(params, input_size, *, block_batch=4096,
                              matmul_dtype=jnp.bfloat16):
    """Pack params ONCE (outside the hot path) and return a jitted forward(x)->(batch,1)."""
    packed, offsets, _ = pack_params(params, input_size, dtype=matmul_dtype)
    kernel = functools.partial(mlp_kernel, input_size=input_size, offsets=offsets,
                               matmul_dtype=matmul_dtype)
    param_bytes = int(packed.size * packed.dtype.itemsize)

    @jax.jit
    def forward(x):
        batch = x.shape[0]
        assert x.shape[1] == input_size
        tb = _pick_batch_tile(batch, block_batch)
        grid = (pl.cdiv(batch, tb),)
        cost = pl.CostEstimate(
            flops=2 * batch * (input_size * HID1 + HID1 * HID2 + HID2 * HID3 + HID3 * OUT),
            transcendentals=0,
            bytes_accessed=int(x.size * x.dtype.itemsize) + batch * 4 + param_bytes)
        return pl.pallas_call(
            kernel,
            out_shape=jax.ShapeDtypeStruct((batch, OUT), jnp.float32),
            grid=grid,
            in_specs=[
                # x tiles: last dim equals the full array dim -> no wrapper-side pad.
                pl.BlockSpec((tb, input_size), lambda i: (i, 0)),
                # packed params: constant index_map -> VMEM-resident; single-buffered.
                pl.BlockSpec(packed.shape, lambda i: (0, 0),
                             pipeline_mode=pl.Buffered(1)),
            ],
            out_specs=pl.BlockSpec((tb, OUT), lambda i: (i, 0)),
            compiler_params=pltpu.CompilerParams(
                dimension_semantics=("parallel",),      # shard batch tiles across TCs
                vmem_limit_bytes=32 * 1024 * 1024),
            cost_estimate=cost,
        )(x, packed)

    return forward


def init_params(key, input_size):
    """Deterministic init matching the PyTorch module's shapes.
    PyTorch stores Linear weight as (out, in); we keep the (in, out) transpose."""
    dims = [(input_size, HID1), (HID1, HID2), (HID2, HID3), (HID3, OUT)]
    params = {}
    for i, (fan_in, fan_out) in enumerate(dims, start=1):
        key, kw, kb = jax.random.split(key, 3)
        bound = 1.0 / jnp.sqrt(fan_in)
        params[f"w{i}"] = jax.random.uniform(
            kw, (fan_in, fan_out), jnp.float32, -bound, bound)
        params[f"b{i}"] = jax.random.uniform(
            kb, (1, fan_out), jnp.float32, -bound, bound)
    return params


def reference_forward(x, params):
    h = jnp.maximum(x @ params["w1"] + params["b1"], 0.0)
    h = jnp.maximum(h @ params["w2"] + params["b2"], 0.0)
    h = jnp.maximum(h @ params["w3"] + params["b3"], 0.0)
    return h @ params["w4"] + params["b4"]


if __name__ == "__main__":
    input_size = 11   # wine-quality feature count

    key = jax.random.PRNGKey(0)
    key, kp = jax.random.split(key)
    params = init_params(kp, input_size)

    # Params are packed once per configuration, outside the per-call hot path.
    fwd_f32 = make_wine_quality_forward(params, input_size, matmul_dtype=jnp.float32)
    fwd_bf16 = make_wine_quality_forward(params, input_size)            # bf16 default
    fwd_f32_tiled = make_wine_quality_forward(params, input_size, block_batch=64,
                                              matmul_dtype=jnp.float32)

    # Case 1: small single-tile batch, f32 operands (tight tolerance).
    key, k1 = jax.random.split(key)
    x1 = jax.random.normal(k1, (32, input_size), jnp.float32)
    out1 = jax.block_until_ready(fwd_f32(x1))
    ref1 = reference_forward(x1, params)
    assert out1.shape == (32, 1)
    assert jnp.allclose(out1, ref1, atol=1e-3, rtol=1e-3)

    # Case 2: 2-step grid (v7x megacore split) with a partial last tile, default bf16.
    key, k2 = jax.random.split(key)
    x2 = jax.random.normal(k2, (300, input_size), jnp.float32)
    out2 = jax.block_until_ready(fwd_bf16(x2))
    ref2 = reference_forward(x2, params)
    assert out2.shape == (300, 1)
    assert jnp.allclose(out2, ref2, atol=1e-1, rtol=1e-1)

    # Case 3: many grid steps (5 tiles, params stay VMEM-resident), f32 operands.
    out3 = jax.block_until_ready(fwd_f32_tiled(x2))
    assert out3.shape == (300, 1)
    assert jnp.allclose(out3, ref2, atol=1e-3, rtol=1e-3)

    print("KERNEL_OK")
</pallas_src>

<mosaic_0001>
module attributes {stable_mosaic.version = 11 : i64} {
  func.func @mlp_kernel(%arg0: i32, %arg1: memref<32x11xf32, #tpu.memory_space<vmem>>, %arg2: memref<352x128xf32, #tpu.memory_space<vmem>>, %arg3: memref<32x1xf32, #tpu.memory_space<vmem>>) attributes {dimension_semantics = [#tpu.dimension_semantics<parallel>], iteration_bounds = array<i64: 1>, scalar_prefetch = 0 : i64, scratch_operands = 0 : i64, tpu.core_type = #tpu.core_type<tc>, window_params = [{transform_indices = @transform_0, window_bounds = array<i64: 32, 11>}, {pipeline_mode = #tpu.pipeline_mode<synchronous>, transform_indices = @transform_1, window_bounds = array<i64: 352, 128>}, {transform_indices = @transform_2, window_bounds = array<i64: 32, 1>}]} {
    %c0 = arith.constant 0 : index
    %c0_0 = arith.constant 0 : index
    %0 = vector.load %arg1[%c0, %c0_0] : memref<32x11xf32, #tpu.memory_space<vmem>>, vector<32x11xf32>
    %c0_1 = arith.constant 0 : index
    %c0_2 = arith.constant 0 : index
    %1 = vector.load %arg2[%c0_1, %c0_2] : memref<352x128xf32, #tpu.memory_space<vmem>>, vector<11x128xf32>
    %c16 = arith.constant 16 : index
    %c0_3 = arith.constant 0 : index
    %2 = vector.load %arg2[%c16, %c0_3] : memref<352x128xf32, #tpu.memory_space<vmem>>, vector<1x128xf32>
    %cst = arith.constant dense<0.000000e+00> : vector<32x128xf32>
    %3 = tpu.matmul %0, %1, %cst {dimension_numbers = #tpu.dot_dimension_numbers<[1], [0], [0], [1], [0, 0, 1, 1], [], []>} : vector<32x11xf32>, vector<11x128xf32>, vector<32x128xf32> -> vector<32x128xf32>
    %4 = vector.broadcast %2 : vector<1x128xf32> to vector<32x128xf32>
    %5 = arith.addf %3, %4 : vector<32x128xf32>
    %cst_4 = arith.constant 0.000000e+00 : f32
    %6 = vector.broadcast %cst_4 : f32 to vector<32x128xf32>
    %7 = arith.maximumf %5, %6 : vector<32x128xf32>
    %c32 = arith.constant 32 : index
    %c0_5 = arith.constant 0 : index
    %8 = vector.load %arg2[%c32, %c0_5] : memref<352x128xf32, #tpu.memory_space<vmem>>, vector<128x128xf32>
    %c160 = arith.constant 160 : index
    %c0_6 = arith.constant 0 : index
    %9 = vector.load %arg2[%c160, %c0_6] : memref<352x128xf32, #tpu.memory_space<vmem>>, vector<1x128xf32>
    %cst_7 = arith.constant dense<0.000000e+00> : vector<32x128xf32>
    %10 = tpu.matmul %7, %8, %cst_7 {dimension_numbers = #tpu.dot_dimension_numbers<[1], [0], [0], [1], [0, 0, 1, 1], [], []>} : vector<32x128xf32>, vector<128x128xf32>, vector<32x128xf32> -> vector<32x128xf32>
    %11 = vector.broadcast %9 : vector<1x128xf32> to vector<32x128xf32>
    %12 = arith.addf %10, %11 : vector<32x128xf32>
    %cst_8 = arith.constant 0.000000e+00 : f32
    %13 = vector.broadcast %cst_8 : f32 to vector<32x128xf32>
    %14 = arith.maximumf %12, %13 : vector<32x128xf32>
    %c176 = arith.constant 176 : index
    %c0_9 = arith.constant 0 : index
    %15 = vector.load %arg2[%c176, %c0_9] : memref<352x128xf32, #tpu.memory_space<vmem>>, vector<128x128xf32>
    %c304 = arith.constant 304 : index
    %c0_10 = arith.constant 0 : index
    %16 = vector.load %arg2[%c304, %c0_10] : memref<352x128xf32, #tpu.memory_space<vmem>>, vector<1x128xf32>
    %cst_11 = arith.constant dense<0.000000e+00> : vector<32x128xf32>
    %17 = tpu.matmul %14, %15, %cst_11 {dimension_numbers = #tpu.dot_dimension_numbers<[1], [0], [0], [1], [0, 0, 1, 1], [], []>} : vector<32x128xf32>, vector<128x128xf32>, vector<32x128xf32> -> vector<32x128xf32>
    %18 = vector.broadcast %16 : vector<1x128xf32> to vector<32x128xf32>
    %19 = arith.addf %17, %18 : vector<32x128xf32>
    %cst_12 = arith.constant 0.000000e+00 : f32
    %20 = vector.broadcast %cst_12 : f32 to vector<32x128xf32>
    %21 = arith.maximumf %19, %20 : vector<32x128xf32>
    %c320 = arith.constant 320 : index
    %c0_13 = arith.constant 0 : index
    %22 = vector.load %arg2[%c320, %c0_13] : memref<352x128xf32, #tpu.memory_space<vmem>>, vector<1x128xf32>
    %c336 = arith.constant 336 : index
    %c0_14 = arith.constant 0 : index
    %23 = vector.load %arg2[%c336, %c0_14] : memref<352x128xf32, #tpu.memory_space<vmem>>, vector<1x128xf32>
    %24 = vector.broadcast %22 : vector<1x128xf32> to vector<32x128xf32>
    %25 = arith.mulf %21, %24 : vector<32x128xf32>
    %26 = vector.broadcast %23 : vector<1x128xf32> to vector<32x128xf32>
    %27 = arith.addf %25, %26 : vector<32x128xf32>
    %cst_15 = arith.constant dense<0.000000e+00> : vector<32xf32>
    %28 = vector.multi_reduction <add>, %27, %cst_15 [1] : vector<32x128xf32> to vector<32xf32>
    %29 = vector.shape_cast %28 : vector<32xf32> to vector<32x1xf32>
    %c0_16 = arith.constant 0 : index
    %c0_17 = arith.constant 0 : index
    %30 = vector.load %arg3[%c0_16, %c0_17] : memref<32x1xf32, #tpu.memory_space<vmem>>, vector<32x1xf32>
    tpu.vector_store %arg3[%c0_16, %c0_17], %29 {strides = array<i32>} : memref<32x1xf32, #tpu.memory_space<vmem>>, vector<32x1xf32>,
    return
  }
  func.func @transform_0(%arg0: i32) -> (i32, i32) {
    %c0_i32 = arith.constant 0 : i32
    %c0_i32_0 = arith.constant 0 : i32
    return %arg0, %c0_i32 : i32, i32
  }
  func.func @transform_1(%arg0: i32) -> (i32, i32) {
    %c0_i32 = arith.constant 0 : i32
    %c0_i32_0 = arith.constant 0 : i32
    %c0_i32_1 = arith.constant 0 : i32
    return %c0_i32, %c0_i32_0 : i32, i32
  }
  func.func @transform_2(%arg0: i32) -> (i32, i32) {
    %c0_i32 = arith.constant 0 : i32
    %c0_i32_0 = arith.constant 0 : i32
    return %arg0, %c0_i32 : i32, i32
  }
}

</mosaic_0001>

<llo_original>
// kernel: forward.1
$region0: #{forward.1}
  #allocation0 [shape = 'u32[]', space=smem, size = 0x4, offset = 0x4, fixed_abs, tag = 'smem constant byte address 0x4 - core index']
  #allocation1 [shape = 'u32[144,128]{1,0:T(1,128)}', space=vmem, size = 0x12000, scoped, tag = 'internal scratch']
  %s0 = inlined_call_operand.vmem [shape: f32[32,11], index: 0, kind: input, shape index: {}]
  %s1 = inlined_call_operand.hbm [shape: f32[352,128], index: 1, kind: input, shape index: {}]
  %s2 = inlined_call_operand.vmem [shape: f32[32,1], index: 2, kind: output, shape index: {}]
  %s3 = sld [smem:[#allocation0]]
  $region22: #{forward.1} parent=0
    _
  %s5 = ssub.s32 1, %s3
  %s6 = scalar_select 0, %s5, %s3
  $region1: #{forward.1} parent=0
    #allocation2 [shape = 'u8[180224]{0}', space=vmem, size = 0x2c000, scoped, tag = 'input window, operand 1, single buffered']
    #allocation3 [shape = 's32[1]{0}', space=sflag, size = 0x4, scoped, tag = 'scoped memory for forward.1']
    %7 = vsyncpa [#allocation3], 0
    // Predicated region
    $region2: #{forward.1} parent=1 // pred_check
      _
    $region3: #{forward.1} parent=1 // pred_check_branch
      %9 = sbr.rel (0) target = $region5
    $region4: #{forward.1} parent=1 // pred_region
      _
    $region5: #{forward.1} parent=1 // pred_fallthru
      _
    // Predicated region
    $region6: #{forward.1} parent=1 // pred_check
      _
    $region7: #{forward.1} parent=1 // pred_check_branch
      %11 = sbr.rel (0) target = $region9
    $region8: #{forward.1} parent=1 // pred_region
      %s13 = ssub.s32 5632, 5632
      %14 = vsyncadd [#allocation3], %s13
      %s15 = sshll.u32 [#allocation2], 4
      %s16 = int_to_ptr.vmem [resolvable:$true] %s15
      %21 = dma.hbm_to_vmem [thread:$0]  %s1, 5632, %s16, [#allocation3], 128, 128, 8
    $region9: #{forward.1} parent=1 // pred_fallthru
      _
    // Predicated region
    $region10: #{forward.1} parent=1 // pred_check
      _
    $region11: #{forward.1} parent=1 // pred_check_branch
      %23 = sbr.rel (0) target = $region13
    $region12: #{forward.1} parent=1 // pred_region
      %24 = dma.done [#allocation3], 5632
    $region13: #{forward.1} parent=1 // pred_fallthru
      _
    %v25 = vld [vmem:[%s0] sm:$0xff]
    %v26 = vld [vmem:[%s0 + $0x8] sm:$0xff]
    %v27 = vld [vmem:[%s0 + $0x10] sm:$0xff]
    %v28 = vld [vmem:[%s0 + $0x18] sm:$0xff]
    %v29 = vld [vmem:[#allocation2] sm:$0xff]
    %v30 = vld [vmem:[#allocation2 + $0x8] sm:$0x7]
    %v31 = vld [vmem:[#allocation2 + $0x10] sm:$0x1]
    %v32 = vlaneseq
    %v33 = vshrl.u32 %v32, 7
    %v34 = vsub.s32 0, %v33
    %v35 = vrot.slane %v31, %v34
    %vm36 = vcmask 89088
    %v38 = vsel %vm36, %v25, 0
    %v41 = vsel %vm36, %v26, 0
    %v44 = vsel %vm36, %v27, 0
    %v47 = vsel %vm36, %v28, 0
    %vm49 = vcmask 1042432
    %v51 = vsel %vm49, %v30, 0
    %53 = vmatprep.subr.mxu0 0.0
    %54 = vmatpush1.msra.mxu0 0.0
    %55 = vmatprep.subr.mxu0 0.0
    %56 = vmatpush1.msra.mxu0 0.0
    %57 = vmatprep.subr.mxu0 0.0
    %58 = vmatpush1.msra.mxu0 0.0
    %59 = vmatprep.subr.mxu0 0.0
    %60 = vmatpush1.msra.mxu0 0.0
    %61 = vmatprep.subr.mxu0 0.0
    %62 = vmatpush1.msra.mxu0 0.0
    %63 = vmatprep.subr.mxu0 0.0
    %64 = vmatpush1.msra.mxu0 0.0
    %65 = vmatprep.subr.mxu0 0.0
    %66 = vmatpush1.msra.mxu0 0.0
    %67 = vmatprep.subr.mxu0 0.0
    %68 = vmatpush1.msra.mxu0 0.0
    %69 = vmatprep.subr.mxu0 0.0
    %70 = vmatpush1.msra.mxu0 0.0
    %71 = vmatprep.subr.mxu0 0.0
    %72 = vmatpush1.msra.mxu0 0.0
    %73 = vmatprep.subr.mxu0 0.0
    %74 = vmatpush1.msra.mxu0 0.0
    %75 = vmatprep.subr.mxu0 0.0
    %76 = vmatpush1.msra.mxu0 0.0
    %77 = vmatprep.subr.mxu0 0.0
    %78 = vmatpush1.msra.mxu0 0.0
    %79 = vmatprep.subr.mxu0 0.0
    %80 = vmatpush1.msra.mxu0 0.0
    %81 = vmatprep.subr.mxu0 0.0
    %82 = vmatpush1.msra.mxu0 %v51
    %83 = vmatprep.subr.mxu0 0.0
    %84 = vmatpush1.msra.mxu0 %v29
    %85 = vmatprep.subr.mxu0 0.0
    %86 = vmatpush2.msra.mxu0 0.0
    %87 = vmatprep.subr.mxu0 0.0
    %88 = vmatpush2.msra.mxu0 0.0
    %89 = vmatprep.subr.mxu0 0.0
    %90 = vmatpush2.msra.mxu0 0.0
    %91 = vmatprep.subr.mxu0 0.0
    %92 = vmatpush2.msra.mxu0 0.0
    %93 = vmatprep.subr.mxu0 0.0
    %94 = vmatpush2.msra.mxu0 0.0
    %95 = vmatprep.subr.mxu0 0.0
    %96 = vmatpush2.msra.mxu0 0.0
    %97 = vmatprep.subr.mxu0 0.0
    %98 = vmatpush2.msra.mxu0 0.0
    %99 = vmatprep.subr.mxu0 0.0
    %100 = vmatpush2.msra.mxu0 0.0
    %101 = vmatprep.subr.mxu0 0.0
    %102 = vmatpush2.msra.mxu0 0.0
    %103 = vmatprep.subr.mxu0 0.0
    %104 = vmatpush2.msra.mxu0 0.0
    %105 = vmatprep.subr.mxu0 0.0
    %106 = vmatpush2.msra.mxu0 0.0
    %107 = vmatprep.subr.mxu0 0.0
    %108 = vmatpush2.msra.mxu0 0.0
    %109 = vmatprep.subr.mxu0 0.0
    %110 = vmatpush2.msra.mxu0 0.0
    %111 = vmatprep.subr.mxu0 0.0
    %112 = vmatpush2.msra.mxu0 0.0
    %113 = vmatprep.subr.mxu0 0.0
    %114 = vmatpush2.msra.mxu0 0.0
    %115 = vmatprep.subr.mxu0 0.0
    %116 = vmatpush2.msra.mxu0 0.0
    %117 = vmatprep.mubr.f32.mxu0 0.0
    %118 = vmatmul.mubr.f32.gmra.mxu0 %v38
    %v119 = vpop.f32.mrf.mxu0
    %v120 = vadd.f32 %v35, %v119
    %v121 = vpop.f32.mrf.mxu0
    %122 = vmatprep.mubr.f32.mxu0 0.0
    %123 = vmatmul.mubr.f32.gmra.mxu0 %v41
    %v124 = vpop.f32.mrf.mxu0
    %v125 = vadd.f32 %v35, %v124
    %v126 = vpop.f32.mrf.mxu0
    %127 = vmatprep.mubr.f32.mxu0 0.0
    %128 = vmatmul.mubr.f32.gmra.mxu0 %v44
    %v129 = vpop.f32.mrf.mxu0
    %v130 = vadd.f32 %v35, %v129
    %v131 = vpop.f32.mrf.mxu0
    %132 = vmatprep.mubr.f32.mxu0 0.0
    %133 = vmatmul.mubr.f32.gmra.mxu0 %v47
    %v134 = vpop.f32.mrf.mxu0
    %v135 = vadd.f32 %v35, %v134
    %v136 = vpop.f32.mrf.mxu0
    %137 = vdwg.mxu0
    %v138 = vmax.f32 %v120, 0.0
    %v139 = vmax.f32 %v125, 0.0
    %v140 = vmax.f32 %v130, 0.0
    %v141 = vmax.f32 %v135, 0.0
    %v142 = vld [vmem:[#allocation2 + $0x20] sm:$0xff]
    %v143 = vld [vmem:[#allocation2 + $0x28] sm:$0xff]
    %v144 = vld [vmem:[#allocation2 + $0x30] sm:$0xff]
    %v145 = vld [vmem:[#allocation2 + $0x38] sm:$0xff]
    %v146 = vld [vmem:[#allocation2 + $0x40] sm:$0xff]
    %v147 = vld [vmem:[#allocation2 + $0x48] sm:$0xff]
    %v148 = vld [vmem:[#allocation2 + $0x50] sm:$0xff]
    %v149 = vld [vmem:[#allocation2 + $0x58] sm:$0xff]
    %v150 = vld [vmem:[#allocation2 + $0x60] sm:$0xff]
    %v151 = vld [vmem:[#allocation2 + $0x68] sm:$0xff]
    %v152 = vld [vmem:[#allocation2 + $0x70] sm:$0xff]
    %v153 = vld [vmem:[#allocation2 + $0x78] sm:$0xff]
    %v154 = vld [vmem:[#allocation2 + $0x80] sm:$0xff]
    %v155 = vld [vmem:[#allocation2 + $0x88] sm:$0xff]
    %v156 = vld [vmem:[#allocation2 + $0x90] sm:$0xff]
    %v157 = vld [vmem:[#allocation2 + $0x98] sm:$0xff]
    %v158 = vld [vmem:[#allocation2 + $0xa0] sm:$0x1]
    %v159 = vlaneseq
    %v160 = vshrl.u32 %v159, 7
    %v161 = vsub.s32 0, %v160
    %v162 = vrot.slane %v158, %v161
    %163 = vmatprep.subr.mxu0 0.0
    %164 = vmatpush1.msra.mxu0 %v157
    %165 = vmatprep.subr.mxu0 0.0
    %166 = vmatpush1.msra.mxu0 %v156
    %167 = vmatprep.subr.mxu0 0.0
    %168 = vmatpush1.msra.mxu0 %v155
    %169 = vmatprep.subr.mxu0 0.0
    %170 = vmatpush1.msra.mxu0 %v154
    %171 = vmatprep.subr.mxu0 0.0
    %172 = vmatpush1.msra.mxu0 %v153
    %173 = vmatprep.subr.mxu0 0.0
    %174 = vmatpush1.msra.mxu0 %v152
    %175 = vmatprep.subr.mxu0 0.0
    %176 = vmatpush1.msra.mxu0 %v151
    %177 = vmatprep.subr.mxu0 0.0
    %178 = vmatpush1.msra.mxu0 %v150
    %179 = vmatprep.subr.mxu0 0.0
    %180 = vmatpush1.msra.mxu0 %v149
    %181 = vmatprep.subr.mxu0 0.0
    %182 = vmatpush1.msra.mxu0 %v148
    %183 = vmatprep.subr.mxu0 0.0
    %184 = vmatpush1.msra.mxu0 %v147
    %185 = vmatprep.subr.mxu0 0.0
    %186 = vmatpush1.msra.mxu0 %v146
    %187 = vmatprep.subr.mxu0 0.0
    %188 = vmatpush1.msra.mxu0 %v145
    %189 = vmatprep.subr.mxu0 0.0
    %190 = vmatpush1.msra.mxu0 %v144
    %191 = vmatprep.subr.mxu0 0.0
    %192 = vmatpush1.msra.mxu0 %v143
    %193 = vmatprep.subr.mxu0 0.0
    %194 = vmatpush1.msra.mxu0 %v142
    %195 = vmatprep.subr.mxu0 0.0
    %196 = vmatpush2.msra.mxu0 0.0
    %197 = vmatprep.subr.mxu0 0.0
    %198 = vmatpush2.msra.mxu0 0.0
    %199 = vmatprep.subr.mxu0 0.0
    %200 = vmatpush2.msra.mxu0 0.0
    %201 = vmatprep.subr.mxu0 0.0
    %202 = vmatpush2.msra.mxu0 0.0
    %203 = vmatprep.subr.mxu0 0.0
    %204 = vmatpush2.msra.mxu0 0.0
    %205 = vmatprep.subr.mxu0 0.0
    %206 = vmatpush2.msra.mxu0 0.0
    %207 = vmatprep.subr.mxu0 0.0
    %208 = vmatpush2.msra.mxu0 0.0
    %209 = vmatprep.subr.mxu0 0.0
    %210 = vmatpush2.msra.mxu0 0.0
    %211 = vmatprep.subr.mxu0 0.0
    %212 = vmatpush2.msra.mxu0 0.0
    %213 = vmatprep.subr.mxu0 0.0
    %214 = vmatpush2.msra.mxu0 0.0
    %215 = vmatprep.subr.mxu0 0.0
    %216 = vmatpush2.msra.mxu0 0.0
    %217 = vmatprep.subr.mxu0 0.0
    %218 = vmatpush2.msra.mxu0 0.0
    %219 = vmatprep.subr.mxu0 0.0
    %220 = vmatpush2.msra.mxu0 0.0
    %221 = vmatprep.subr.mxu0 0.0
    %222 = vmatpush2.msra.mxu0 0.0
    %223 = vmatprep.subr.mxu0 0.0
    %224 = vmatpush2.msra.mxu0 0.0
    %225 = vmatprep.subr.mxu0 0.0
    %226 = vmatpush2.msra.mxu0 0.0
    %227 = vmatprep.mubr.f32.mxu0 0.0
    %228 = vmatmul.mubr.f32.gmra.mxu0 %v138
    %v229 = vpop.f32.mrf.mxu0
    %v230 = vadd.f32 %v162, %v229
    %v231 = vpop.f32.mrf.mxu0
    %232 = vmatprep.mubr.f32.mxu0 0.0
    %233 = vmatmul.mubr.f32.gmra.mxu0 %v139
    %v234 = vpop.f32.mrf.mxu0
    %v235 = vadd.f32 %v162, %v234
    %v236 = vpop.f32.mrf.mxu0
    %237 = vmatprep.mubr.f32.mxu0 0.0
    %238 = vmatmul.mubr.f32.gmra.mxu0 %v140
    %v239 = vpop.f32.mrf.mxu0
    %v240 = vadd.f32 %v162, %v239
    %v241 = vpop.f32.mrf.mxu0
    %242 = vmatprep.mubr.f32.mxu0 0.0
    %243 = vmatmul.mubr.f32.gmra.mxu0 %v141
    %v244 = vpop.f32.mrf.mxu0
    %v245 = vadd.f32 %v162, %v244
    %v246 = vpop.f32.mrf.mxu0
    %247 = vdwg.mxu0
    %v248 = vmax.f32 %v230, 0.0
    %v249 = vmax.f32 %v235, 0.0
    %v250 = vmax.f32 %v240, 0.0
    %v251 = vmax.f32 %v245, 0.0
    %v252 = vld [vmem:[#allocation2 + $0xb0] sm:$0xff]
    %v253 = vld [vmem:[#allocation2 + $0xb8] sm:$0xff]
    %v254 = vld [vmem:[#allocation2 + $0xc0] sm:$0xff]
    %v255 = vld [vmem:[#allocation2 + $0xc8] sm:$0xff]
    %v256 = vld [vmem:[#allocation2 + $0xd0] sm:$0xff]
    %v257 = vld [vmem:[#allocation2 + $0xd8] sm:$0xff]
    %v258 = vld [vmem:[#allocation2 + $0xe0] sm:$0xff]
    %v259 = vld [vmem:[#allocation2 + $0xe8] sm:$0xff]
    %v260 = vld [vmem:[#allocation2 + $0xf0] sm:$0xff]
    %v261 = vld [vmem:[#allocation2 + $0xf8] sm:$0xff]
    %v262 = vld [vmem:[#allocation2 + $0x100] sm:$0xff]
    %v263 = vld [vmem:[#allocation2 + $0x108] sm:$0xff]
    %v264 = vld [vmem:[#allocation2 + $0x110] sm:$0xff]
    %v265 = vld [vmem:[#allocation2 + $0x118] sm:$0xff]
    %v266 = vld [vmem:[#allocation2 + $0x120] sm:$0xff]
    %v267 = vld [vmem:[#allocation2 + $0x128] sm:$0xff]
    %v268 = vld [vmem:[#allocation2 + $0x130] sm:$0x1]
    %v269 = vlaneseq
    %v270 = vshrl.u32 %v269, 7
    %v271 = vsub.s32 0, %v270
    %v272 = vrot.slane %v268, %v271
    %273 = vmatprep.subr.mxu0 0.0
    %274 = vmatpush1.msra.mxu0 %v267
    %275 = vmatprep.subr.mxu0 0.0
    %276 = vmatpush1.msra.mxu0 %v266
    %277 = vmatprep.subr.mxu0 0.0
    %278 = vmatpush1.msra.mxu0 %v265
    %279 = vmatprep.subr.mxu0 0.0
    %280 = vmatpush1.msra.mxu0 %v264
    %281 = vmatprep.subr.mxu0 0.0
    %282 = vmatpush1.msra.mxu0 %v263
    %283 = vmatprep.subr.mxu0 0.0
    %284 = vmatpush1.msra.mxu0 %v262
    %285 = vmatprep.subr.mxu0 0.0
    %286 = vmatpush1.msra.mxu0 %v261
    %287 = vmatprep.subr.mxu0 0.0
    %288 = vmatpush1.msra.mxu0 %v260
    %289 = vmatprep.subr.mxu0 0.0
    %290 = vmatpush1.msra.mxu0 %v259
    %291 = vmatprep.subr.mxu0 0.0
    %292 = vmatpush1.msra.mxu0 %v258
    %293 = vmatprep.subr.mxu0 0.0
    %294 = vmatpush1.msra.mxu0 %v257
    %295 = vmatprep.subr.mxu0 0.0
    %296 = vmatpush1.msra.mxu0 %v256
    %297 = vmatprep.subr.mxu0 0.0
    %298 = vmatpush1.msra.mxu0 %v255
    %299 = vmatprep.subr.mxu0 0.0
    %300 = vmatpush1.msra.mxu0 %v254
    %301 = vmatprep.subr.mxu0 0.0
    %302 = vmatpush1.msra.mxu0 %v253
    %303 = vmatprep.subr.mxu0 0.0
    %304 = vmatpush1.msra.mxu0 %v252
    %305 = vmatprep.subr.mxu0 0.0
    %306 = vmatpush2.msra.mxu0 0.0
    %307 = vmatprep.subr.mxu0 0.0
    %308 = vmatpush2.msra.mxu0 0.0
    %309 = vmatprep.subr.mxu0 0.0
    %310 = vmatpush2.msra.mxu0 0.0
    %311 = vmatprep.subr.mxu0 0.0
    %312 = vmatpush2.msra.mxu0 0.0
    %313 = vmatprep.subr.mxu0 0.0
    %314 = vmatpush2.msra.mxu0 0.0
    %315 = vmatprep.subr.mxu0 0.0
    %316 = vmatpush2.msra.mxu0 0.0
    %317 = vmatprep.subr.mxu0 0.0
    %318 = vmatpush2.msra.mxu0 0.0
    %319 = vmatprep.subr.mxu0 0.0
    %320 = vmatpush2.msra.mxu0 0.0
    %321 = vmatprep.subr.mxu0 0.0
    %322 = vmatpush2.msra.mxu0 0.0
    %323 = vmatprep.subr.mxu0 0.0
    %324 = vmatpush2.msra.mxu0 0.0
    %325 = vmatprep.subr.mxu0 0.0
    %326 = vmatpush2.msra.mxu0 0.0
    %327 = vmatprep.subr.mxu0 0.0
    %328 = vmatpush2.msra.mxu0 0.0
    %329 = vmatprep.subr.mxu0 0.0
    %330 = vmatpush2.msra.mxu0 0.0
    %331 = vmatprep.subr.mxu0 0.0
    %332 = vmatpush2.msra.mxu0 0.0
    %333 = vmatprep.subr.mxu0 0.0
    %334 = vmatpush2.msra.mxu0 0.0
    %335 = vmatprep.subr.mxu0 0.0
    %336 = vmatpush2.msra.mxu0 0.0
    %337 = vmatprep.mubr.f32.mxu0 0.0
    %338 = vmatmul.mubr.f32.gmra.mxu0 %v248
    %v339 = vpop.f32.mrf.mxu0
    %v340 = vadd.f32 %v272, %v339
    %v341 = vpop.f32.mrf.mxu0
    %342 = vmatprep.mubr.f32.mxu0 0.0
    %343 = vmatmul.mubr.f32.gmra.mxu0 %v249
    %v344 = vpop.f32.mrf.mxu0
    %v345 = vadd.f32 %v272, %v344
    %v346 = vpop.f32.mrf.mxu0
    %347 = vmatprep.mubr.f32.mxu0 0.0
    %348 = vmatmul.mubr.f32.gmra.mxu0 %v250
    %v349 = vpop.f32.mrf.mxu0
    %v350 = vadd.f32 %v272, %v349
    %v351 = vpop.f32.mrf.mxu0
    %352 = vmatprep.mubr.f32.mxu0 0.0
    %353 = vmatmul.mubr.f32.gmra.mxu0 %v251
    %v354 = vpop.f32.mrf.mxu0
    %v355 = vadd.f32 %v272, %v354
    %v356 = vpop.f32.mrf.mxu0
    %357 = vdwg.mxu0
    %v358 = vmax.f32 %v340, 0.0
    %v359 = vmax.f32 %v345, 0.0
    %v360 = vmax.f32 %v350, 0.0
    %v361 = vmax.f32 %v355, 0.0
    %v362 = vld [vmem:[#allocation2 + $0x140] sm:$0x1]
    %v363 = vld [vmem:[#allocation2 + $0x150] sm:$0x1]
    %v364 = vlaneseq
    %v365 = vshrl.u32 %v364, 7
    %v366 = vsub.s32 0, %v365
    %v367 = vrot.slane %v362, %v366
    %v368 = vmul.f32 %v358, %v367
    %v369 = vmul.f32 %v359, %v367
    %v370 = vmul.f32 %v360, %v367
    %v371 = vmul.f32 %v361, %v367
    %v372 = vlaneseq
    %v373 = vshrl.u32 %v372, 7
    %v374 = vsub.s32 0, %v373
    %v375 = vrot.slane %v363, %v374
    %v376 = vadd.f32 %v368, %v375
    %v377 = vadd.f32 %v369, %v375
    %v378 = vadd.f32 %v370, %v375
    %v379 = vadd.f32 %v371, %v375
    %380 = vadd.xlane.f32.xlu0 %v376
    %v381 = vpop.xlane.xlu0 %380
    %382 = vadd.xlane.f32.xlu0 %v377
    %v383 = vpop.xlane.xlu0 %382
    %384 = vadd.xlane.f32.xlu0 %v378
    %v385 = vpop.xlane.xlu0 %384
    %386 = vadd.xlane.f32.xlu0 %v379
    %v387 = vpop.xlane.xlu0 %386
    %vm388 = vcmask 7168
    %389 = vst.msk [vmem:[%s2] sm:$0xff] %vm388, %v381
    %390 = vst.msk [vmem:[%s2 + $0x8] sm:$0xff] %vm388, %v383
    %391 = vst.msk [vmem:[%s2 + $0x10] sm:$0xff] %vm388, %v385
    %392 = vst.msk [vmem:[%s2 + $0x18] sm:$0xff] %vm388, %v387
    // Predicated region
    $region14: #{forward.1} parent=1 // pred_check
      _
    $region15: #{forward.1} parent=1 // pred_check_branch
      %394 = sbr.rel (0) target = $region17
    $region16: #{forward.1} parent=1 // pred_region
      _
    $region17: #{forward.1} parent=1 // pred_fallthru
      _
    // Predicated region
    $region18: #{forward.1} parent=1 // pred_check
      _
    $region19: #{forward.1} parent=1 // pred_check_branch
      %396 = sbr.rel (0) target = $region21
    $region20: #{forward.1} parent=1 // pred_region
      _
    $region21: #{forward.1} parent=1 // pred_fallthru
      _
    %397 = vsyncpa [#allocation3], 1

</llo_original>
